<compile_context>
chip_gen: v7x
topology: tpu7x:2x2x1
jax: 0.10.0
libtpu: 0.0.40
codegen_flags: <defaults>
</compile_context>

<pallas_src>
import functools

import jax
import jax.numpy as jnp
import numpy as np
from jax.experimental import pallas as pl
from jax.experimental.pallas import tpu as pltpu

_LANE = 128


def _round_up(a, b):
    return (a + b - 1) // b * b


def _vmem_budget_bytes():
    """~75% of this core's VMEM capacity; conservative 48 MiB fallback."""
    try:
        cap = int(pltpu.get_tpu_info().vmem_capacity_bytes)
        return int(0.75 * cap)
    except Exception:
        return 48 << 20


# --------------------------------------------------------------------------
# Kernels
# --------------------------------------------------------------------------
def _make_resident_kernel(K, C):
    """grid = (branch,).  The whole per-branch A^T is VMEM-resident, so A is
    streamed from HBM once (not K times) and all stores are lane-dense."""

    def kernel(xt_ref, at_ref, w_ref, b_ref, out_ref, xs_ref):
        # xt_ref : (C, Np)            bf16  x^T (zero-padded columns)
        # at_ref : (1, Np, Np)        bf16  this branch's A^T
        # w_ref  : (1, 2H, (K+1)*C)   bf16  fused [W_k | W_har]^T
        # b_ref  : (1, 2H, 1)         f32   [bias ; 0]
        # out_ref: (1, 2H, Np)        f32   [z_branch ; z_har]^T
        # xs_ref : ((K+1)*C, Np)      bf16  chain [x_0^T ; ... ; x_K^T]
        at = at_ref[0]
        xs_ref[0:C, :] = xt_ref[...]
        for k in range(K):                       # static unroll (K is small)
            prev = xs_ref[k * C:(k + 1) * C, :]                  # (C, Np)
            nxt = jnp.dot(prev, at, preferred_element_type=jnp.float32)
            xs_ref[(k + 1) * C:(k + 2) * C, :] = nxt.astype(xs_ref.dtype)
        # One fused lane-dense projection: (2H,(K+1)C) @ ((K+1)C, Np).
        z = jnp.dot(w_ref[0], xs_ref[...], preferred_element_type=jnp.float32)
        out_ref[0] = z + b_ref[0]

    return kernel


def _make_streamed_kernel(K, C, tile_n):
    """grid = (branch, k, col_block).  Fallback for large N: A^T streamed as
    (Np, tile_n) column tiles (re-read once per k step), the x_k^T chain kept
    in VMEM scratch, projection + output writeback only on the final k step."""

    def kernel(xt_ref, at_ref, w_ref, b_ref, out_ref, xs_ref):
        # xt_ref : (C, Np)            bf16
        # at_ref : (1, Np, tile_n)    bf16  column tile of this branch's A^T
        # w_ref  : (1, 2H, (K+1)*C)   bf16
        # b_ref  : (1, 2H, 1)         f32
        # out_ref: (1, 2H, tile_n)    f32
        # xs_ref : (K+1, C, Np)       bf16  chain x_0^T .. x_K^T
        k = pl.program_id(1)
        i = pl.program_id(2)
        col0 = pl.multiple_of(i * tile_n, tile_n)

        @pl.when((k == 0) & (i == 0))
        def _init():                            # one-time copy, no select
            xs_ref[0] = xt_ref[...]

        prev = xs_ref[k]                                         # (C, Np)
        nxt = jnp.dot(prev, at_ref[0], preferred_element_type=jnp.float32)
        xs_ref[k + 1, :, pl.ds(col0, tile_n)] = nxt.astype(xs_ref.dtype)

        @pl.when(k == K - 1)
        def _project():
            # Sublane-axis concat of the (C, tile_n) chain pieces (cheap,
            # 16-row aligned) -> one fused lane-dense projection.
            xcat = jnp.concatenate(
                [xs_ref[j, :, pl.ds(col0, tile_n)] for j in range(K + 1)],
                axis=0)                                  # ((K+1)*C, tile_n)
            z = jnp.dot(w_ref[0], xcat, preferred_element_type=jnp.float32)
            out_ref[0] = z + b_ref[0]

    return kernel


# --------------------------------------------------------------------------
# Plain-JAX glue (densification, fused weights, sizing)
# --------------------------------------------------------------------------
def _dense_adj_t(edge_index, edge_weight, num_nodes, dtype=jnp.float32):
    """A^T densified.  PyG add-aggr: A[dst, src] += w  =>  A^T[src, dst] += w."""
    src, dst = edge_index[0], edge_index[1]
    if edge_weight is None:
        edge_weight = jnp.ones(src.shape[0], dtype=dtype)
    at = jnp.zeros((num_nodes, num_nodes), dtype=dtype)
    return at.at[src, dst].add(edge_weight.astype(dtype))


def _dense_adj(edge_index, edge_weight, num_nodes, dtype=jnp.float32):
    """A densified (reference only)."""
    src, dst = edge_index[0], edge_index[1]
    if edge_weight is None:
        edge_weight = jnp.ones(src.shape[0], dtype=dtype)
    a = jnp.zeros((num_nodes, num_nodes), dtype=dtype)
    return a.at[dst, src].add(edge_weight.astype(dtype))


def _fused_weights_t(params, K, c, h, cdt):
    """W_fused^T per branch: rows [0:H] = [W_0^T | ... | W_K^T],
    rows [H:2H] = [W_har^T | 0];  bias column [bias ; 0]."""
    def branch_rows(w):                          # w: (K+1, C, H)
        return w.reshape((K + 1) * c, h).T       # (H, (K+1)*C)

    har_rows = jnp.concatenate(
        [params["w_har"].T, jnp.zeros((h, K * c), params["w_har"].dtype)],
        axis=1)                                  # (H, (K+1)*C)
    w_low_t = jnp.concatenate([branch_rows(params["w_low"]), har_rows], axis=0)
    w_up_t = jnp.concatenate([branch_rows(params["w_up"]), har_rows], axis=0)
    w_stk = jnp.stack([w_low_t, w_up_t]).astype(cdt)       # (2, 2H, (K+1)*C)

    zeros_h = jnp.zeros((h, 1), jnp.float32)
    b_stk = jnp.stack(
        [jnp.concatenate([params["b_low"].reshape(h, 1), zeros_h], axis=0),
         jnp.concatenate([params["b_up"].reshape(h, 1), zeros_h], axis=0)])
    return w_stk, b_stk                                     # (2, 2H, 1) f32


def _pick_stream_tile(np_, c, h, K, budget, max_tile=4096):
    """Largest multiple-of-128 column tile dividing Np that fits the VMEM
    budget with default double buffering of the A^T tile and the output."""
    fixed = ((K + 1) * c * np_ * 2          # xs chain scratch (bf16)
             + 2 * c * np_ * 2              # x^T block x2 buffers
             + 2 * 2 * (2 * h) * (K + 1) * c  # fused weights x2
             + (2 << 20))                   # slack
    best = _LANE
    t = _LANE
    while t <= min(np_, max_tile):
        if np_ % t == 0:
            per_tile = 2 * np_ * t * 2 + 2 * (2 * h) * t * 4
            if fixed + per_tile <= budget:
                best = t
        t += _LANE
    return best


def init_sc_layer_params(key, in_channels, hidden_channels, K=3):
    """Deterministic synthetic parameter init (shapes match the torch module)."""
    ks = jax.random.split(key, 5)
    scale = 1.0 / np.sqrt(in_channels)
    w_low = jax.random.uniform(ks[0], (K + 1, in_channels, hidden_channels),
                               jnp.float32, -scale, scale)
    w_up = jax.random.uniform(ks[1], (K + 1, in_channels, hidden_channels),
                              jnp.float32, -scale, scale)
    w_har = jax.random.uniform(ks[2], (in_channels, hidden_channels),
                               jnp.float32, -scale, scale)
    # torch reset_parameters() zeros the SMConv bias; use small nonzero values
    # here to exercise the bias-add path deterministically.
    b_low = 0.01 * jax.random.normal(ks[3], (1, hidden_channels), jnp.float32)
    b_up = 0.01 * jax.random.normal(ks[4], (1, hidden_channels), jnp.float32)
    return dict(w_low=w_low, w_up=w_up, w_har=w_har, b_low=b_low, b_up=b_up)


# --------------------------------------------------------------------------
# Forward
# --------------------------------------------------------------------------
@functools.partial(jax.jit,
                   static_argnames=("K", "sum_components", "force_streamed"))
def sc_layer_forward(params, x, lower_index, upper_index,
                     lower_values=None, upper_values=None,
                     K=3, sum_components=False, force_streamed=False):
    assert K >= 1
    n, c = x.shape
    h = params["w_har"].shape[1]
    two_h = 2 * h
    np_ = max(_round_up(n, _LANE), _LANE)     # pad simplex count -> lane-dense

    cdt = jnp.bfloat16                        # MXU input dtype; f32 accumulate

    # Densify the sparse neighbourhoods, already transposed (plain-JAX glue).
    # TODO(synk): for large sparse complexes replace densification with a
    # scalar-prefetch gather / segment-sum formulation instead of streaming
    # O(N^2) mostly-zero adjacency columns.
    at_low = _dense_adj_t(lower_index, lower_values, np_).astype(cdt)
    at_up = _dense_adj_t(upper_index, upper_values, np_).astype(cdt)
    at_stk = jnp.stack([at_low, at_up])                    # (2, Np, Np) bf16

    xt = jnp.zeros((c, np_), cdt).at[:, :n].set(x.T.astype(cdt))   # (C, Np)
    w_stk, b_stk = _fused_weights_t(params, K, c, h, cdt)

    budget = _vmem_budget_bytes()

    # Resident-A fit test (assume default double buffering on every operand).
    resident_need = (2 * np_ * np_ * 2            # A^T block x2 buffers, bf16
                     + (K + 1) * c * np_ * 2      # xs chain scratch
                     + 2 * c * np_ * 2            # x^T block x2
                     + 2 * two_h * np_ * 4        # out block x2, f32
                     + 2 * 2 * two_h * (K + 1) * c
                     + (2 << 20))
    use_resident = (resident_need <= budget) and (not force_streamed)

    flops = 2 * 2 * K * c * np_ * np_ + 2 * 2 * (K + 1) * c * two_h * np_

    if use_resident:
        kernel = _make_resident_kernel(K, c)
        grid_spec = pltpu.PrefetchScalarGridSpec(
            num_scalar_prefetch=0,
            grid=(2,),
            in_specs=[
                pl.BlockSpec((c, np_), lambda b: (0, 0)),              # x^T
                pl.BlockSpec((1, np_, np_), lambda b: (b, 0, 0)),      # A^T
                pl.BlockSpec((1, two_h, (K + 1) * c),
                             lambda b: (b, 0, 0)),                     # W fused
                pl.BlockSpec((1, two_h, 1), lambda b: (b, 0, 0)),      # bias
            ],
            out_specs=pl.BlockSpec((1, two_h, np_), lambda b: (b, 0, 0)),
            scratch_shapes=[pltpu.VMEM(((K + 1) * c, np_), cdt)],
        )
        dims = ("parallel",)                      # branch axis -> megacore
        bytes_accessed = (2 * np_ * np_ * 2 + c * np_ * 2
                          + 2 * two_h * (K + 1) * c * 2 + 2 * two_h * np_ * 4)
    else:
        tile_n = _pick_stream_tile(np_, c, h, K, budget)
        nb = np_ // tile_n
        kernel = _make_streamed_kernel(K, c, tile_n)
        last_k = K - 1
        grid_spec = pltpu.PrefetchScalarGridSpec(
            num_scalar_prefetch=0,
            grid=(2, K, nb),
            in_specs=[
                pl.BlockSpec((c, np_), lambda b, k, i: (0, 0)),            # x^T
                pl.BlockSpec((1, np_, tile_n), lambda b, k, i: (b, 0, i)),  # A^T
                pl.BlockSpec((1, two_h, (K + 1) * c),
                             lambda b, k, i: (b, 0, 0)),                   # W
                pl.BlockSpec((1, two_h, 1), lambda b, k, i: (b, 0, 0)),    # bias
            ],
            # Freeze the output block at column-block 0 until the projection
            # step so each output tile is written back to HBM exactly once.
            out_specs=pl.BlockSpec(
                (1, two_h, tile_n),
                lambda b, k, i: (b, jnp.where(k == last_k, i, 0), 0)),
            scratch_shapes=[pltpu.VMEM((K + 1, c, np_), cdt)],
        )
        dims = ("parallel", "arbitrary", "arbitrary")
        bytes_accessed = (2 * K * np_ * np_ * 2 + c * np_ * 2
                          + 2 * two_h * (K + 1) * c * 2 + 2 * two_h * np_ * 4)

    out = pl.pallas_call(
        kernel,
        out_shape=jax.ShapeDtypeStruct((2, two_h, np_), jnp.float32),
        grid_spec=grid_spec,
        compiler_params=pltpu.CompilerParams(
            dimension_semantics=dims,
            vmem_limit_bytes=int(budget),
        ),
        cost_estimate=pl.CostEstimate(flops=int(flops), transcendentals=0,
                                      bytes_accessed=int(bytes_accessed)),
    )(xt, at_stk, w_stk, b_stk)

    # Transposed, padded output slab -> module outputs.
    z_low = out[0, :h, :n].T
    z_up = out[1, :h, :n].T
    z_har = out[0, h:, :n].T
    if sum_components:
        return z_low + z_up + z_har
    return {"z_low": z_low, "z_up": z_up, "z_har": z_har}


# --------------------------------------------------------------------------
# Pure-JAX reference (with the kernel's bf16 input/intermediate quantization,
# f32 accumulation) for a tight comparison.
# --------------------------------------------------------------------------
def _reference_forward(params, x, lower_index, upper_index,
                       lower_values, upper_values, K):
    n = x.shape[0]
    q = lambda a: a.astype(jnp.bfloat16).astype(jnp.float32)
    xq = q(x)

    def smconv(a, w_stack, bias):
        aq, wq = q(a), q(w_stack)
        out = xq @ wq[0]
        xk = xq
        for k in range(1, K + 1):
            xk = q(aq @ xk)
            out = out + xk @ wq[k]
        return out + bias

    a_low = _dense_adj(lower_index, lower_values, n)
    a_up = _dense_adj(upper_index, upper_values, n)
    return {
        "z_low": smconv(a_low, params["w_low"], params["b_low"]),
        "z_up": smconv(a_up, params["w_up"], params["b_up"]),
        "z_har": xq @ q(params["w_har"]),
    }


if __name__ == "__main__":
    key = jax.random.PRNGKey(0)
    k_x, k_p, k_el, k_eu, k_wl, k_wu = jax.random.split(key, 6)

    N, C_IN, HIDDEN, K = 8, 16, 32, 3
    E_LOW, E_UP = 20, 18

    x = jax.random.normal(k_x, (N, C_IN), jnp.float32)
    params = init_sc_layer_params(k_p, C_IN, HIDDEN, K)

    lower_index = jax.random.randint(k_el, (2, E_LOW), 0, N, jnp.int32)
    upper_index = jax.random.randint(k_eu, (2, E_UP), 0, N, jnp.int32)
    lower_values = jax.random.normal(k_wl, (E_LOW,), jnp.float32)
    upper_values = jax.random.normal(k_wu, (E_UP,), jnp.float32)

    ref = _reference_forward(params, x, lower_index, upper_index,
                             lower_values, upper_values, K)

    # Resident-A^T path (auto-selected at this size).
    out = sc_layer_forward(params, x, lower_index, upper_index,
                           lower_values, upper_values, K=K)
    jax.block_until_ready(out)
    for name in ("z_low", "z_up", "z_har"):
        np.testing.assert_allclose(np.asarray(out[name]),
                                   np.asarray(ref[name]),
                                   rtol=2e-2, atol=5e-2)

    # Streamed fallback path (forced, so it is exercised at small shapes too).
    out_s = sc_layer_forward(params, x, lower_index, upper_index,
                             lower_values, upper_values, K=K,
                             force_streamed=True)
    jax.block_until_ready(out_s)
    for name in ("z_low", "z_up", "z_har"):
        np.testing.assert_allclose(np.asarray(out_s[name]),
                                   np.asarray(ref[name]),
                                   rtol=2e-2, atol=5e-2)

    # sum_components=True path.
    s = sc_layer_forward(params, x, lower_index, upper_index,
                         lower_values, upper_values, K=K, sum_components=True)
    jax.block_until_ready(s)
    np.testing.assert_allclose(
        np.asarray(s),
        np.asarray(ref["z_low"] + ref["z_up"] + ref["z_har"]),
        rtol=2e-2, atol=5e-2)

    print("KERNEL_OK")
</pallas_src>

<mosaic_0001>
module attributes {stable_mosaic.version = 11 : i64} {
  func.func @kernel(%arg0: i32, %arg1: memref<16x128xbf16, #tpu.memory_space<vmem>>, %arg2: memref<1x128x128xbf16, #tpu.memory_space<vmem>>, %arg3: memref<1x64x64xbf16, #tpu.memory_space<vmem>>, %arg4: memref<1x64x1xf32, #tpu.memory_space<vmem>>, %arg5: memref<1x64x128xf32, #tpu.memory_space<vmem>>, %arg6: memref<64x128xbf16, #tpu.memory_space<vmem>>) attributes {dimension_semantics = [#tpu.dimension_semantics<parallel>], iteration_bounds = array<i64: 2>, scalar_prefetch = 0 : i64, scratch_operands = 1 : i64, tpu.core_type = #tpu.core_type<tc>, window_params = [{pipeline_mode = #tpu.pipeline_mode<synchronous>, transform_indices = @transform_0, window_bounds = array<i64: 16, 128>}, {transform_indices = @transform_1, window_bounds = array<i64: 1, 128, 128>}, {transform_indices = @transform_2, window_bounds = array<i64: 1, 64, 64>}, {transform_indices = @transform_3, window_bounds = array<i64: 1, 64, 1>}, {transform_indices = @transform_4, window_bounds = array<i64: 1, 64, 128>}]} {
    %c0 = arith.constant 0 : index
    %c0_0 = arith.constant 0 : index
    %c0_1 = arith.constant 0 : index
    %0 = vector.load %arg2[%c0, %c0_0, %c0_1] : memref<1x128x128xbf16, #tpu.memory_space<vmem>>, vector<1x128x128xbf16>
    %1 = vector.shape_cast %0 : vector<1x128x128xbf16> to vector<128x128xbf16>
    %c0_2 = arith.constant 0 : index
    %c0_3 = arith.constant 0 : index
    %2 = vector.load %arg1[%c0_2, %c0_3] : memref<16x128xbf16, #tpu.memory_space<vmem>>, vector<16x128xbf16>
    %c0_4 = arith.constant 0 : index
    %c0_5 = arith.constant 0 : index
    %3 = vector.load %arg6[%c0_4, %c0_5] : memref<64x128xbf16, #tpu.memory_space<vmem>>, vector<16x128xbf16>
    tpu.vector_store %arg6[%c0_4, %c0_5], %2 {strides = array<i32>} : memref<64x128xbf16, #tpu.memory_space<vmem>>, vector<16x128xbf16>,
    %c0_6 = arith.constant 0 : index
    %c0_7 = arith.constant 0 : index
    %4 = vector.load %arg6[%c0_6, %c0_7] : memref<64x128xbf16, #tpu.memory_space<vmem>>, vector<16x128xbf16>
    %cst = arith.constant dense<0.000000e+00> : vector<16x128xf32>
    %5 = tpu.matmul %4, %1, %cst {dimension_numbers = #tpu.dot_dimension_numbers<[1], [0], [0], [1], [0, 0, 1, 1], [], []>} : vector<16x128xbf16>, vector<128x128xbf16>, vector<16x128xf32> -> vector<16x128xf32>
    %6 = arith.truncf %5 : vector<16x128xf32> to vector<16x128xbf16>
    %c16 = arith.constant 16 : index
    %c0_8 = arith.constant 0 : index
    %7 = vector.load %arg6[%c16, %c0_8] : memref<64x128xbf16, #tpu.memory_space<vmem>>, vector<16x128xbf16>
    tpu.vector_store %arg6[%c16, %c0_8], %6 {strides = array<i32>} : memref<64x128xbf16, #tpu.memory_space<vmem>>, vector<16x128xbf16>,
    %c16_9 = arith.constant 16 : index
    %c0_10 = arith.constant 0 : index
    %8 = vector.load %arg6[%c16_9, %c0_10] : memref<64x128xbf16, #tpu.memory_space<vmem>>, vector<16x128xbf16>
    %cst_11 = arith.constant dense<0.000000e+00> : vector<16x128xf32>
    %9 = tpu.matmul %8, %1, %cst_11 {dimension_numbers = #tpu.dot_dimension_numbers<[1], [0], [0], [1], [0, 0, 1, 1], [], []>} : vector<16x128xbf16>, vector<128x128xbf16>, vector<16x128xf32> -> vector<16x128xf32>
    %10 = arith.truncf %9 : vector<16x128xf32> to vector<16x128xbf16>
    %c32 = arith.constant 32 : index
    %c0_12 = arith.constant 0 : index
    %11 = vector.load %arg6[%c32, %c0_12] : memref<64x128xbf16, #tpu.memory_space<vmem>>, vector<16x128xbf16>
    tpu.vector_store %arg6[%c32, %c0_12], %10 {strides = array<i32>} : memref<64x128xbf16, #tpu.memory_space<vmem>>, vector<16x128xbf16>,
    %c32_13 = arith.constant 32 : index
    %c0_14 = arith.constant 0 : index
    %12 = vector.load %arg6[%c32_13, %c0_14] : memref<64x128xbf16, #tpu.memory_space<vmem>>, vector<16x128xbf16>
    %cst_15 = arith.constant dense<0.000000e+00> : vector<16x128xf32>
    %13 = tpu.matmul %12, %1, %cst_15 {dimension_numbers = #tpu.dot_dimension_numbers<[1], [0], [0], [1], [0, 0, 1, 1], [], []>} : vector<16x128xbf16>, vector<128x128xbf16>, vector<16x128xf32> -> vector<16x128xf32>
    %14 = arith.truncf %13 : vector<16x128xf32> to vector<16x128xbf16>
    %c48 = arith.constant 48 : index
    %c0_16 = arith.constant 0 : index
    %15 = vector.load %arg6[%c48, %c0_16] : memref<64x128xbf16, #tpu.memory_space<vmem>>, vector<16x128xbf16>
    tpu.vector_store %arg6[%c48, %c0_16], %14 {strides = array<i32>} : memref<64x128xbf16, #tpu.memory_space<vmem>>, vector<16x128xbf16>,
    %c0_17 = arith.constant 0 : index
    %c0_18 = arith.constant 0 : index
    %c0_19 = arith.constant 0 : index
    %16 = vector.load %arg3[%c0_17, %c0_18, %c0_19] : memref<1x64x64xbf16, #tpu.memory_space<vmem>>, vector<1x64x64xbf16>
    %17 = vector.shape_cast %16 : vector<1x64x64xbf16> to vector<64x64xbf16>
    %c0_20 = arith.constant 0 : index
    %c0_21 = arith.constant 0 : index
    %18 = vector.load %arg6[%c0_20, %c0_21] : memref<64x128xbf16, #tpu.memory_space<vmem>>, vector<64x128xbf16>
    %cst_22 = arith.constant dense<0.000000e+00> : vector<64x128xf32>
    %19 = tpu.matmul %17, %18, %cst_22 {dimension_numbers = #tpu.dot_dimension_numbers<[1], [0], [0], [1], [0, 0, 1, 1], [], []>} : vector<64x64xbf16>, vector<64x128xbf16>, vector<64x128xf32> -> vector<64x128xf32>
    %c0_23 = arith.constant 0 : index
    %c0_24 = arith.constant 0 : index
    %c0_25 = arith.constant 0 : index
    %20 = vector.load %arg4[%c0_23, %c0_24, %c0_25] : memref<1x64x1xf32, #tpu.memory_space<vmem>>, vector<1x64x1xf32>
    %21 = vector.shape_cast %20 : vector<1x64x1xf32> to vector<64x1xf32>
    %22 = vector.broadcast %21 : vector<64x1xf32> to vector<64x128xf32>
    %23 = arith.addf %19, %22 : vector<64x128xf32>
    %c0_26 = arith.constant 0 : index
    %c0_27 = arith.constant 0 : index
    %c0_28 = arith.constant 0 : index
    %24 = vector.load %arg5[%c0_26, %c0_27, %c0_28] : memref<1x64x128xf32, #tpu.memory_space<vmem>>, vector<1x64x128xf32>
    %25 = vector.shape_cast %24 : vector<1x64x128xf32> to vector<64x128xf32>
    %26 = vector.shape_cast %23 : vector<64x128xf32> to vector<1x64x128xf32>
    tpu.vector_store %arg5[%c0_26, %c0_27, %c0_28], %26 {strides = array<i32>} : memref<1x64x128xf32, #tpu.memory_space<vmem>>, vector<1x64x128xf32>,
    return
  }
  func.func @transform_0(%arg0: i32) -> (i32, i32) {
    %c0_i32 = arith.constant 0 : i32
    %c0_i32_0 = arith.constant 0 : i32
    %c0_i32_1 = arith.constant 0 : i32
    return %c0_i32, %c0_i32_0 : i32, i32
  }
  func.func @transform_1(%arg0: i32) -> (i32, i32, i32) {
    %c0_i32 = arith.constant 0 : i32
    %c0_i32_0 = arith.constant 0 : i32
    %c0_i32_1 = arith.constant 0 : i32
    return %arg0, %c0_i32, %c0_i32_0 : i32, i32, i32
  }
  func.func @transform_2(%arg0: i32) -> (i32, i32, i32) {
    %c0_i32 = arith.constant 0 : i32
    %c0_i32_0 = arith.constant 0 : i32
    %c0_i32_1 = arith.constant 0 : i32
    return %arg0, %c0_i32, %c0_i32_0 : i32, i32, i32
  }
  func.func @transform_3(%arg0: i32) -> (i32, i32, i32) {
    %c0_i32 = arith.constant 0 : i32
    %c0_i32_0 = arith.constant 0 : i32
    %c0_i32_1 = arith.constant 0 : i32
    return %arg0, %c0_i32, %c0_i32_0 : i32, i32, i32
  }
  func.func @transform_4(%arg0: i32) -> (i32, i32, i32) {
    %c0_i32 = arith.constant 0 : i32
    %c0_i32_0 = arith.constant 0 : i32
    %c0_i32_1 = arith.constant 0 : i32
    return %arg0, %c0_i32, %c0_i32_0 : i32, i32, i32
  }
}

</mosaic_0001>

<llo_original>
// kernel: sc_layer_forward.1
$region0: #{sc_layer_forward.1}
  #allocation0 [shape = 'u32[]', space=smem, size = 0x4, offset = 0x4, fixed_abs, tag = 'smem constant byte address 0x4 - core index']
  #allocation1 [shape = 'u32[144,128]{1,0:T(1,128)}', space=vmem, size = 0x12000, scoped, tag = 'internal scratch']
  #allocation2 [shape = 'bf16[64,128]{1,0:T(16,128)(2,1)}', space=vmem, size = 0x4000, scoped, tag = 'scratch operand']
  %s0 = inlined_call_operand.vmem [shape: bf16[16,128], index: 0, kind: input, shape index: {}]
  %s1 = inlined_call_operand.vmem [shape: bf16[2,128,128], index: 1, kind: input, shape index: {}]
  %s2 = inlined_call_operand.vmem [shape: bf16[2,64,64], index: 2, kind: input, shape index: {}]
  %s3 = inlined_call_operand.vmem [shape: f32[2,64,1], index: 3, kind: input, shape index: {}]
  %s4 = inlined_call_operand.vmem [shape: f32[2,64,128], index: 4, kind: output, shape index: {}]
  %s5 = sld [smem:[#allocation0]]
  $region49: #{sc_layer_forward.1} parent=0
    _
  %s7 = ssub.s32 1, %s5
  %s8 = scalar_select 0, %s7, %s5
  loop: start=0, step=1, limit=4
  $region2: #{sc_layer_forward.1} parent=0 // loop_pre_header
    _
  $region3: #{sc_layer_forward.1} parent=0 // loop_header
    %s10 = sphi 0, %s14
    %p11 = scmp.ge.s32.totalorder %s10, 4
    %s18 = sphi 0, %s18
    %s20 = sphi 0, %s18
    %s21 = sphi 0, %s20
    %s35 = sphi 0, %s21
    %s41 = sphi 0, %s43
    %s44 = sphi 0, %s41
    %s45 = sphi 0, %s44
    %s61 = sphi 0, %s45
    %s67 = sphi 0, %s69
    %s70 = sphi 0, %s67
    %s71 = sphi 0, %s70
    %s87 = sphi 0, %s71
    %s93 = sphi 0, %s95
    %s96 = sphi 0, %s93
    %s97 = sphi 0, %s96
    %s113 = sphi 0, %s97
    %s119 = sphi 0, %s121
    %s122 = sphi 0, %s119
    %s123 = sphi 0, %s122
    %s139 = sphi 0, %s123
  $region4: #{sc_layer_forward.1} parent=0 // loop_header_branch
    %13 = sbr.rel (%p11) target = $region8
  $region5: #{sc_layer_forward.1} parent=0 // loop_body
    %s15 = ssub.s32 %s10, 1
    %s16 = ssub.s32 %s10, 2
    %s17 = sadd.s32 %s10, 1
    %s19 = sadd.s32 %s18, 1
    %p22 = scmp.eq.s32.totalorder %s10, 1
    %p23 = scmp.ne.s32.totalorder %s18, %s20
    %p24 = scmp.eq.s32.totalorder %s10, 0
    %p25 = por %p23, %p24
    %p26 = scmp.ne.s32.totalorder %s18, %s20
    %p27 = scmp.eq.s32.totalorder %s15, 1
    %p28 = por %p26, %p27
    %p29 = scmp.ne.s32.totalorder %s20, %s21
    %p30 = scmp.eq.s32.totalorder %s15, 0
    %p31 = por %p29, %p30
    %p32 = scmp.ne.s32.totalorder %s20, %s21
    %p33 = scmp.eq.s32.totalorder %s16, 1
    %p34 = por %p32, %p33
    %p36 = scmp.ne.s32.totalorder %s21, %s35
    %p37 = scmp.eq.s32.totalorder %s16, 0
    %p38 = por %p36, %p37
    %s39 = ssub.s32 %s10, %s17
    %p40 = scmp.eq.s32.totalorder %s39, 0
    %s42 = sadd.s32 %s41, 1
    %s43 = scalar_select %p40, %s41, %s42
    %p46 = pneg %p40
    %p47 = scmp.eq.s32.totalorder %s10, 1
    %p48 = por %p46, %p47
    %p49 = scmp.ne.s32.totalorder %s41, %s44
    %p50 = scmp.eq.s32.totalorder %s10, 0
    %p51 = por %p49, %p50
    %p52 = scmp.ne.s32.totalorder %s41, %s44
    %p53 = scmp.eq.s32.totalorder %s15, 1
    %p54 = por %p52, %p53
    %p55 = scmp.ne.s32.totalorder %s44, %s45
    %p56 = scmp.eq.s32.totalorder %s15, 0
    %p57 = por %p55, %p56
    %p58 = scmp.ne.s32.totalorder %s44, %s45
    %p59 = scmp.eq.s32.totalorder %s16, 1
    %p60 = por %p58, %p59
    %p62 = scmp.ne.s32.totalorder %s45, %s61
    %p63 = scmp.eq.s32.totalorder %s16, 0
    %p64 = por %p62, %p63
    %s65 = ssub.s32 %s10, %s17
    %p66 = scmp.eq.s32.totalorder %s65, 0
    %s68 = sadd.s32 %s67, 1
    %s69 = scalar_select %p66, %s67, %s68
    %p72 = pneg %p66
    %p73 = scmp.eq.s32.totalorder %s10, 1
    %p74 = por %p72, %p73
    %p75 = scmp.ne.s32.totalorder %s67, %s70
    %p76 = scmp.eq.s32.totalorder %s10, 0
    %p77 = por %p75, %p76
    %p78 = scmp.ne.s32.totalorder %s67, %s70
    %p79 = scmp.eq.s32.totalorder %s15, 1
    %p80 = por %p78, %p79
    %p81 = scmp.ne.s32.totalorder %s70, %s71
    %p82 = scmp.eq.s32.totalorder %s15, 0
    %p83 = por %p81, %p82
    %p84 = scmp.ne.s32.totalorder %s70, %s71
    %p85 = scmp.eq.s32.totalorder %s16, 1
    %p86 = por %p84, %p85
    %p88 = scmp.ne.s32.totalorder %s71, %s87
    %p89 = scmp.eq.s32.totalorder %s16, 0
    %p90 = por %p88, %p89
    %s91 = ssub.s32 %s10, %s17
    %p92 = scmp.eq.s32.totalorder %s91, 0
    %s94 = sadd.s32 %s93, 1
    %s95 = scalar_select %p92, %s93, %s94
    %p98 = pneg %p92
    %p99 = scmp.eq.s32.totalorder %s10, 1
    %p100 = por %p98, %p99
    %p101 = scmp.ne.s32.totalorder %s93, %s96
    %p102 = scmp.eq.s32.totalorder %s10, 0
    %p103 = por %p101, %p102
    %p104 = scmp.ne.s32.totalorder %s93, %s96
    %p105 = scmp.eq.s32.totalorder %s15, 1
    %p106 = por %p104, %p105
    %p107 = scmp.ne.s32.totalorder %s96, %s97
    %p108 = scmp.eq.s32.totalorder %s15, 0
    %p109 = por %p107, %p108
    %p110 = scmp.ne.s32.totalorder %s96, %s97
    %p111 = scmp.eq.s32.totalorder %s16, 1
    %p112 = por %p110, %p111
    %p114 = scmp.ne.s32.totalorder %s97, %s113
    %p115 = scmp.eq.s32.totalorder %s16, 0
    %p116 = por %p114, %p115
    %s117 = ssub.s32 %s10, %s17
    %p118 = scmp.eq.s32.totalorder %s117, 0
    %s120 = sadd.s32 %s119, 1
    %s121 = scalar_select %p118, %s119, %s120
    %p124 = pneg %p118
    %p125 = scmp.eq.s32.totalorder %s10, 1
    %p126 = por %p124, %p125
    %p127 = scmp.ne.s32.totalorder %s119, %s122
    %p128 = scmp.eq.s32.totalorder %s10, 0
    %p129 = por %p127, %p128
    %p130 = scmp.ne.s32.totalorder %s119, %s122
    %p131 = scmp.eq.s32.totalorder %s15, 1
    %p132 = por %p130, %p131
    %p133 = scmp.ne.s32.totalorder %s122, %s123
    %p134 = scmp.eq.s32.totalorder %s15, 0
    %p135 = por %p133, %p134
    %p136 = scmp.ne.s32.totalorder %s122, %s123
    %p137 = scmp.eq.s32.totalorder %s16, 1
    %p138 = por %p136, %p137
    %p140 = scmp.ne.s32.totalorder %s123, %s139
    %p141 = scmp.eq.s32.totalorder %s16, 0
    %p142 = por %p140, %p141
    %p143 = scmp.le.s32.totalorder 1, %s10
    %p144 = scmp.lt.s32.totalorder %s10, 3
    %p145 = pnand %p143, %p144
    %p146 = pneg %p145
    // Predicated region
    $region9: #{sc_layer_forward.1} parent=5 // pred_check
      _
    $region10: #{sc_layer_forward.1} parent=5 // pred_check_branch
      %148 = sbr.rel (%p145) target = $region12
    $region11: #{sc_layer_forward.1} parent=5 // pred_region
      %s149 = ssub.s32 %s10, 1
      // Predicated region
      $region13: #{sc_layer_forward.1} parent=11 // pred_check
        %p150 = pneg %p31
      $region14: #{sc_layer_forward.1} parent=11 // pred_check_branch
        %152 = sbr.rel (%p150) target = $region16
      $region15: #{sc_layer_forward.1} parent=11 // pred_region
        _
      $region16: #{sc_layer_forward.1} parent=11 // pred_fallthru
        _
    $region12: #{sc_layer_forward.1} parent=5 // pred_fallthru
      _
    %p153 = scmp.lt.s32.totalorder %s10, 2
    // Predicated region
    $region17: #{sc_layer_forward.1} parent=5 // pred_check
      %p154 = pneg %p153
    $region18: #{sc_layer_forward.1} parent=5 // pred_check_branch
      %156 = sbr.rel (%p154) target = $region20
    $region19: #{sc_layer_forward.1} parent=5 // pred_region
      // Predicated region
      $region21: #{sc_layer_forward.1} parent=19 // pred_check
        %p157 = pneg %p51
      $region22: #{sc_layer_forward.1} parent=19 // pred_check_branch
        %159 = sbr.rel (%p157) target = $region24
      $region23: #{sc_layer_forward.1} parent=19 // pred_region
        %p160 = scmp.lt.s32.totalorder %s10, 1
        %s161 = scalar_select %p160, %s10, 1
        %s162 = smul.addr %s161, 16
        %s163 = smul.addr %s162, 4
        %s164 = scalar_lea.vmem %s1, %s163
      $region24: #{sc_layer_forward.1} parent=19 // pred_fallthru
        _
      // Predicated region
      $region25: #{sc_layer_forward.1} parent=19 // pred_check
        %p165 = pneg %p77
      $region26: #{sc_layer_forward.1} parent=19 // pred_check_branch
        %167 = sbr.rel (%p165) target = $region28
      $region27: #{sc_layer_forward.1} parent=19 // pred_region
        %p168 = scmp.lt.s32.totalorder %s10, 1
        %s169 = scalar_select %p168, %s10, 1
        %s170 = smul.addr %s169, 8
        %s171 = smul.addr %s170, 4
        %s172 = scalar_lea.vmem %s2, %s171
      $region28: #{sc_layer_forward.1} parent=19 // pred_fallthru
        _
      // Predicated region
      $region29: #{sc_layer_forward.1} parent=19 // pred_check
        %p173 = pneg %p103
      $region30: #{sc_layer_forward.1} parent=19 // pred_check_branch
        %175 = sbr.rel (%p173) target = $region32
      $region31: #{sc_layer_forward.1} parent=19 // pred_region
        %p176 = scmp.lt.s32.totalorder %s10, 1
        %s177 = scalar_select %p176, %s10, 1
        %s178 = smul.addr %s177, 8
        %s179 = smul.addr %s178, 8
        %s180 = scalar_lea.vmem %s3, %s179
      $region32: #{sc_layer_forward.1} parent=19 // pred_fallthru
        _
    $region20: #{sc_layer_forward.1} parent=5 // pred_fallthru
      _
    %p181 = scmp.le.s32.totalorder 1, %s10
    %p182 = scmp.lt.s32.totalorder %s10, 3
    %p183 = pnand %p181, %p182
    %p184 = pneg %p183
    // Predicated region
    $region33: #{sc_layer_forward.1} parent=5 // pred_check
      _
    $region34: #{sc_layer_forward.1} parent=5 // pred_check_branch
      %186 = sbr.rel (%p183) target = $region36
    $region35: #{sc_layer_forward.1} parent=5 // pred_region
      %s187 = ssub.s32 %s10, 1
      %p188 = pneg %p31
      %p189 = pneg %p28
      %p190 = scmp.lt.s32.totalorder %s15, 1
      %s191 = scalar_select %p190, %s15, 1
      %s192 = smul.addr %s191, 16
      %s193 = smul.addr %s192, 4
      %s194 = scalar_lea.vmem %s1, %s193
      %p195 = pneg %p57
      %p196 = pneg %p54
      %p197 = scmp.lt.s32.totalorder %s15, 1
      %s198 = scalar_select %p197, %s15, 1
      %s199 = smul.addr %s198, 8
      %s200 = smul.addr %s199, 4
      %s201 = scalar_lea.vmem %s2, %s200
      %p202 = pneg %p83
      %p203 = pneg %p80
      %p204 = scmp.lt.s32.totalorder %s15, 1
      %s205 = scalar_select %p204, %s15, 1
      %s206 = smul.addr %s205, 8
      %s207 = smul.addr %s206, 8
      %s208 = scalar_lea.vmem %s3, %s207
      %p209 = pneg %p109
      %p210 = pneg %p106
      %p211 = pneg %p135
      %p212 = pneg %p132
      %p213 = scmp.lt.s32.totalorder %s15, 1
      %s214 = scalar_select %p213, %s15, 1
      %s215 = smul.addr %s214, 8
      %s216 = smul.addr %s215, 8
      %s217 = scalar_lea.vmem %s4, %s216
      %p218 = scmp.lt.s32.totalorder %s15, 1
      %s219 = scalar_select %p218, %s15, 1
      %s220 = smul.addr %s219, 16
      %s221 = smul.addr %s220, 4
      %s222 = scalar_lea.vmem %s1, %s221
      %p223 = scmp.lt.s32.totalorder %s15, 1
      %s224 = scalar_select %p223, %s15, 1
      %s225 = smul.addr %s224, 8
      %s226 = smul.addr %s225, 4
      %s227 = scalar_lea.vmem %s2, %s226
      %p228 = scmp.lt.s32.totalorder %s15, 1
      %s229 = scalar_select %p228, %s15, 1
      %s230 = smul.addr %s229, 8
      %s231 = smul.addr %s230, 8
      %s232 = scalar_lea.vmem %s3, %s231
      %p233 = scmp.lt.s32.totalorder %s15, 1
      %s234 = scalar_select %p233, %s15, 1
      %s235 = smul.addr %s234, 8
      %s236 = smul.addr %s235, 8
      %s237 = scalar_lea.vmem %s4, %s236
      %v239 = vld [vmem:[%s222] sm:$0xf]
      %v240 = vld [vmem:[%s222 + $0x4] sm:$0xf]
      %v241 = vld [vmem:[%s222 + $0x8] sm:$0xf]
      %v242 = vld [vmem:[%s222 + $0xc] sm:$0xf]
      %v243 = vld [vmem:[%s222 + $0x10] sm:$0xf]
      %v244 = vld [vmem:[%s222 + $0x14] sm:$0xf]
      %v245 = vld [vmem:[%s222 + $0x18] sm:$0xf]
      %v246 = vld [vmem:[%s222 + $0x1c] sm:$0xf]
      %v247 = vld [vmem:[%s222 + $0x20] sm:$0xf]
      %v248 = vld [vmem:[%s222 + $0x24] sm:$0xf]
      %v249 = vld [vmem:[%s222 + $0x28] sm:$0xf]
      %v250 = vld [vmem:[%s222 + $0x2c] sm:$0xf]
      %v251 = vld [vmem:[%s222 + $0x30] sm:$0xf]
      %v252 = vld [vmem:[%s222 + $0x34] sm:$0xf]
      %v253 = vld [vmem:[%s222 + $0x38] sm:$0xf]
      %v254 = vld [vmem:[%s222 + $0x3c] sm:$0xf]
      %v255 = vld [vmem:[%s0] sm:$0xf]
      %v256 = vld [vmem:[%s0 + $0x4] sm:$0xf]
      %v259 = vunpack.c.l.b16 %v255
      %v260 = vunpack.c.l.b16 %v256
      %v261 = vpack.c.b16 %v260, %v259
      %263 = vst [vmem:[#allocation2] sm:$0xff] %v261
      %v264 = vld [vmem:[#allocation2] sm:$0xff]
      %v281 = vunpack.c.l.b16 %v239
      %v282 = vunpack.c.l.b16 %v240
      %v283 = vunpack.c.l.b16 %v241
      %v284 = vunpack.c.l.b16 %v242
      %v285 = vunpack.c.l.b16 %v243
      %v286 = vunpack.c.l.b16 %v244
      %v287 = vunpack.c.l.b16 %v245
      %v288 = vunpack.c.l.b16 %v246
      %v289 = vunpack.c.l.b16 %v247
      %v290 = vunpack.c.l.b16 %v248
      %v291 = vunpack.c.l.b16 %v249
      %v292 = vunpack.c.l.b16 %v250
      %v293 = vunpack.c.l.b16 %v251
      %v294 = vunpack.c.l.b16 %v252
      %v295 = vunpack.c.l.b16 %v253
      %v296 = vunpack.c.l.b16 %v254
      %v297 = vpack.c.b16 %v282, %v281
      %v298 = vpack.c.b16 %v284, %v283
      %v299 = vpack.c.b16 %v286, %v285
      %v300 = vpack.c.b16 %v288, %v287
      %v301 = vpack.c.b16 %v290, %v289
      %v302 = vpack.c.b16 %v292, %v291
      %v303 = vpack.c.b16 %v294, %v293
      %v304 = vpack.c.b16 %v296, %v295
      %313 = vmatprep.subr.bf16.mxu0 0
      %314 = vmatpush1.bf16.msra.mxu0 %v297
      %315 = vmatprep.subr.bf16.mxu0 0
      %316 = vmatpush1.bf16.msra.mxu0 %v298
      %317 = vmatprep.subr.bf16.mxu0 0
      %318 = vmatpush1.bf16.msra.mxu0 %v299
      %319 = vmatprep.subr.bf16.mxu0 0
      %320 = vmatpush1.bf16.msra.mxu0 %v300
      %321 = vmatprep.subr.bf16.mxu0 0
      %322 = vmatpush1.bf16.msra.mxu0 %v301
      %323 = vmatprep.subr.bf16.mxu0 0
      %324 = vmatpush1.bf16.msra.mxu0 %v302
      %325 = vmatprep.subr.bf16.mxu0 0
      %326 = vmatpush1.bf16.msra.mxu0 %v303
      %327 = vmatprep.subr.bf16.mxu0 0
      %328 = vmatpush1.bf16.msra.mxu0 %v304
      %329 = vmatprep.subr.bf16.mxu0 0
      %330 = vmatpush1.bf16.msra.mxu0 0
      %331 = vmatprep.subr.bf16.mxu0 0
      %332 = vmatpush1.bf16.msra.mxu0 0
      %333 = vmatprep.subr.bf16.mxu0 0
      %334 = vmatpush1.bf16.msra.mxu0 0
      %335 = vmatprep.subr.bf16.mxu0 0
      %336 = vmatpush1.bf16.msra.mxu0 0
      %337 = vmatprep.subr.bf16.mxu0 0
      %338 = vmatpush1.bf16.msra.mxu0 0
      %339 = vmatprep.subr.bf16.mxu0 0
      %340 = vmatpush1.bf16.msra.mxu0 0
      %341 = vmatprep.subr.bf16.mxu0 0
      %342 = vmatpush1.bf16.msra.mxu0 0
      %343 = vmatprep.subr.bf16.mxu0 0
      %344 = vmatpush1.bf16.msra.mxu0 0
      %345 = vmatprep.mubr.bf16.mxu0 0
      %346 = vmatmul.mubr.bf16.gmra.mrb[0].mxu0 %v264
      %v347 = vpop.f32.mrb[0].mxu0
      %v348 = vadd.f32 0.0, %v347
      %v349 = vpop.f32.mrb[0].mxu0
      %v350 = vpop.f32.mrb[0].mxu0
      %v351 = vadd.f32 0.0, %v350
      %v352 = vpop.f32.mrb[0].mxu0
      %353 = vdwg.mxu0
      %v354 = vpack.c.bf16 %v351, %v348
      %355 = vst [vmem:[#allocation2 + $0x8] sm:$0xff] %v354
      %v356 = vld [vmem:[#allocation2 + $0x8] sm:$0xff]
      %357 = vmatprep.subr.bf16.mxu0 0
      %358 = vmatpush1.bf16.msra.mxu0 %v297
      %359 = vmatprep.subr.bf16.mxu0 0
      %360 = vmatpush1.bf16.msra.mxu0 %v298
      %361 = vmatprep.subr.bf16.mxu0 0
      %362 = vmatpush1.bf16.msra.mxu0 %v299
      %363 = vmatprep.subr.bf16.mxu0 0
      %364 = vmatpush1.bf16.msra.mxu0 %v300
      %365 = vmatprep.subr.bf16.mxu0 0
      %366 = vmatpush1.bf16.msra.mxu0 %v301
      %367 = vmatprep.subr.bf16.mxu0 0
      %368 = vmatpush1.bf16.msra.mxu0 %v302
      %369 = vmatprep.subr.bf16.mxu0 0
      %370 = vmatpush1.bf16.msra.mxu0 %v303
      %371 = vmatprep.subr.bf16.mxu0 0
      %372 = vmatpush1.bf16.msra.mxu0 %v304
      %373 = vmatprep.subr.bf16.mxu0 0
      %374 = vmatpush1.bf16.msra.mxu0 0
      %375 = vmatprep.subr.bf16.mxu0 0
      %376 = vmatpush1.bf16.msra.mxu0 0
      %377 = vmatprep.subr.bf16.mxu0 0
      %378 = vmatpush1.bf16.msra.mxu0 0
      %379 = vmatprep.subr.bf16.mxu0 0
      %380 = vmatpush1.bf16.msra.mxu0 0
      %381 = vmatprep.subr.bf16.mxu0 0
      %382 = vmatpush1.bf16.msra.mxu0 0
      %383 = vmatprep.subr.bf16.mxu0 0
      %384 = vmatpush1.bf16.msra.mxu0 0
      %385 = vmatprep.subr.bf16.mxu0 0
      %386 = vmatpush1.bf16.msra.mxu0 0
      %387 = vmatprep.subr.bf16.mxu0 0
      %388 = vmatpush1.bf16.msra.mxu0 0
      %389 = vmatprep.mubr.bf16.mxu0 0
      %390 = vmatmul.mubr.bf16.gmra.mrb[0].mxu0 %v356
      %v391 = vpop.f32.mrb[0].mxu0
      %v392 = vadd.f32 0.0, %v391
      %v393 = vpop.f32.mrb[0].mxu0
      %v394 = vpop.f32.mrb[0].mxu0
      %v395 = vadd.f32 0.0, %v394
      %v396 = vpop.f32.mrb[0].mxu0
      %397 = vdwg.mxu0
      %v398 = vpack.c.bf16 %v395, %v392
      %399 = vst [vmem:[#allocation2 + $0x10] sm:$0xff] %v398
      %v400 = vld [vmem:[#allocation2 + $0x10] sm:$0xff]
      %401 = vmatprep.subr.bf16.mxu0 0
      %402 = vmatpush1.bf16.msra.mxu0 %v297
      %403 = vmatprep.subr.bf16.mxu0 0
      %404 = vmatpush1.bf16.msra.mxu0 %v298
      %405 = vmatprep.subr.bf16.mxu0 0
      %406 = vmatpush1.bf16.msra.mxu0 %v299
      %407 = vmatprep.subr.bf16.mxu0 0
      %408 = vmatpush1.bf16.msra.mxu0 %v300
      %409 = vmatprep.subr.bf16.mxu0 0
      %410 = vmatpush1.bf16.msra.mxu0 %v301
      %411 = vmatprep.subr.bf16.mxu0 0
      %412 = vmatpush1.bf16.msra.mxu0 %v302
      %413 = vmatprep.subr.bf16.mxu0 0
      %414 = vmatpush1.bf16.msra.mxu0 %v303
      %415 = vmatprep.subr.bf16.mxu0 0
      %416 = vmatpush1.bf16.msra.mxu0 %v304
      %417 = vmatprep.subr.bf16.mxu0 0
      %418 = vmatpush1.bf16.msra.mxu0 0
      %419 = vmatprep.subr.bf16.mxu0 0
      %420 = vmatpush1.bf16.msra.mxu0 0
      %421 = vmatprep.subr.bf16.mxu0 0
      %422 = vmatpush1.bf16.msra.mxu0 0
      %423 = vmatprep.subr.bf16.mxu0 0
      %424 = vmatpush1.bf16.msra.mxu0 0
      %425 = vmatprep.subr.bf16.mxu0 0
      %426 = vmatpush1.bf16.msra.mxu0 0
      %427 = vmatprep.subr.bf16.mxu0 0
      %428 = vmatpush1.bf16.msra.mxu0 0
      %429 = vmatprep.subr.bf16.mxu0 0
      %430 = vmatpush1.bf16.msra.mxu0 0
      %431 = vmatprep.subr.bf16.mxu0 0
      %432 = vmatpush1.bf16.msra.mxu0 0
      %433 = vmatprep.mubr.bf16.mxu0 0
      %434 = vmatmul.mubr.bf16.gmra.mrb[0].mxu0 %v400
      %v435 = vpop.f32.mrb[0].mxu0
      %v436 = vadd.f32 0.0, %v435
      %v437 = vpop.f32.mrb[0].mxu0
      %v438 = vpop.f32.mrb[0].mxu0
      %v439 = vadd.f32 0.0, %v438
      %v440 = vpop.f32.mrb[0].mxu0
      %441 = vdwg.mxu0
      %v442 = vpack.c.bf16 %v439, %v436
      %443 = vst [vmem:[#allocation2 + $0x18] sm:$0xff] %v442
      %v444 = vld [vmem:[%s227] sm:$0xf]
      %v445 = vld [vmem:[%s227 + $0x4] sm:$0xf]
      %v446 = vld [vmem:[%s227 + $0x8] sm:$0xf]
      %v447 = vld [vmem:[%s227 + $0xc] sm:$0xf]
      %v448 = vld [vmem:[%s227 + $0x10] sm:$0xf]
      %v449 = vld [vmem:[%s227 + $0x14] sm:$0xf]
      %v450 = vld [vmem:[%s227 + $0x18] sm:$0xf]
      %v451 = vld [vmem:[%s227 + $0x1c] sm:$0xf]
      %v452 = vld [vmem:[#allocation2] sm:$0xff]
      %v453 = vld [vmem:[#allocation2 + $0x8] sm:$0xff]
      %v454 = vld [vmem:[#allocation2 + $0x10] sm:$0xff]
      %v455 = vld [vmem:[#allocation2 + $0x18] sm:$0xff]
      %v456 = vld [vmem:[%s232] sm:$0xff]
      %v457 = vld [vmem:[%s232 + $0x8] sm:$0xff]
      %v458 = vld [vmem:[%s232 + $0x10] sm:$0xff]
      %v459 = vld [vmem:[%s232 + $0x18] sm:$0xff]
      %v460 = vld [vmem:[%s232 + $0x20] sm:$0xff]
      %v461 = vld [vmem:[%s232 + $0x28] sm:$0xff]
      %v462 = vld [vmem:[%s232 + $0x30] sm:$0xff]
      %v463 = vld [vmem:[%s232 + $0x38] sm:$0xff]
      %465 = vset.pattern.permute.xlu0 0
      %466 = vperm.xlu0 %465, %v456
      %v467 = vpop.permute.xlu0 %466
      %470 = vset.pattern.permute.xlu0 0
      %471 = vperm.xlu0 %470, %v457
      %v472 = vpop.permute.xlu0 %471
      %475 = vset.pattern.permute.xlu0 0
      %476 = vperm.xlu0 %475, %v458
      %v477 = vpop.permute.xlu0 %476
      %480 = vset.pattern.permute.xlu0 0
      %481 = vperm.xlu0 %480, %v459
      %v482 = vpop.permute.xlu0 %481
      %485 = vset.pattern.permute.xlu0 0
      %486 = vperm.xlu0 %485, %v460
      %v487 = vpop.permute.xlu0 %486
      %490 = vset.pattern.permute.xlu0 0
      %491 = vperm.xlu0 %490, %v461
      %v492 = vpop.permute.xlu0 %491
      %495 = vset.pattern.permute.xlu0 0
      %496 = vperm.xlu0 %495, %v462
      %v497 = vpop.permute.xlu0 %496
      %500 = vset.pattern.permute.xlu0 0
      %501 = vperm.xlu0 %500, %v463
      %v502 = vpop.permute.xlu0 %501
      %v512 = vunpack.c.l.b16 %v444
      %v513 = vunpack.c.l.b16 %v445
      %v514 = vunpack.c.l.b16 %v446
      %v515 = vunpack.c.l.b16 %v447
      %v516 = vunpack.c.l.b16 %v448
      %v517 = vunpack.c.l.b16 %v449
      %v518 = vunpack.c.l.b16 %v450
      %v519 = vunpack.c.l.b16 %v451
      %v520 = vpack.c.b16 %v513, %v512
      %v521 = vpack.c.b16 %v515, %v514
      %v522 = vpack.c.b16 %v517, %v516
      %v523 = vpack.c.b16 %v519, %v518
      %vm524 = vcmask 523264
      %v526 = vsel %vm524, %v520, 0
      %v529 = vsel %vm524, %v521, 0
      %v532 = vsel %vm524, %v522, 0
      %v535 = vsel %vm524, %v523, 0
      %537 = vmatprep.subr.bf16.mxu0 0
      %538 = vmatpush1.bf16.msra.mxu0 %v452
      %539 = vmatprep.subr.bf16.mxu0 0
      %540 = vmatpush1.bf16.msra.mxu0 %v453
      %541 = vmatprep.subr.bf16.mxu0 0
      %542 = vmatpush1.bf16.msra.mxu0 %v454
      %543 = vmatprep.subr.bf16.mxu0 0
      %544 = vmatpush1.bf16.msra.mxu0 %v455
      %545 = vmatprep.subr.bf16.mxu0 0
      %546 = vmatpush1.bf16.msra.mxu0 0
      %547 = vmatprep.subr.bf16.mxu0 0
      %548 = vmatpush1.bf16.msra.mxu0 0
      %549 = vmatprep.subr.bf16.mxu0 0
      %550 = vmatpush1.bf16.msra.mxu0 0
      %551 = vmatprep.subr.bf16.mxu0 0
      %552 = vmatpush1.bf16.msra.mxu0 0
      %553 = vmatprep.subr.bf16.mxu0 0
      %554 = vmatpush1.bf16.msra.mxu0 0
      %555 = vmatprep.subr.bf16.mxu0 0
      %556 = vmatpush1.bf16.msra.mxu0 0
      %557 = vmatprep.subr.bf16.mxu0 0
      %558 = vmatpush1.bf16.msra.mxu0 0
      %559 = vmatprep.subr.bf16.mxu0 0
      %560 = vmatpush1.bf16.msra.mxu0 0
      %561 = vmatprep.subr.bf16.mxu0 0
      %562 = vmatpush1.bf16.msra.mxu0 0
      %563 = vmatprep.subr.bf16.mxu0 0
      %564 = vmatpush1.bf16.msra.mxu0 0
      %565 = vmatprep.subr.bf16.mxu0 0
      %566 = vmatpush1.bf16.msra.mxu0 0
      %567 = vmatprep.subr.bf16.mxu0 0
      %568 = vmatpush1.bf16.msra.mxu0 0
      %569 = vmatprep.mubr.bf16.mxu0 0
      %570 = vmatmul.mubr.bf16.gmra.mrb[0].mxu0 %v526
      %v571 = vpop.f32.mrb[0].mxu0
      %v572 = vadd.f32 %v467, %v571
      %v573 = vpop.f32.mrb[0].mxu0
      %v574 = vpop.f32.mrb[0].mxu0
      %v575 = vadd.f32 %v472, %v574
      %v576 = vpop.f32.mrb[0].mxu0
      %577 = vmatprep.mubr.bf16.mxu0 0
      %578 = vmatmul.mubr.bf16.gmra.mrb[0].mxu0 %v529
      %v579 = vpop.f32.mrb[0].mxu0
      %v580 = vadd.f32 %v477, %v579
      %v581 = vpop.f32.mrb[0].mxu0
      %v582 = vpop.f32.mrb[0].mxu0
      %v583 = vadd.f32 %v482, %v582
      %v584 = vpop.f32.mrb[0].mxu0
      %585 = vmatprep.mubr.bf16.mxu0 0
      %586 = vmatmul.mubr.bf16.gmra.mrb[0].mxu0 %v532
      %v587 = vpop.f32.mrb[0].mxu0
      %v588 = vadd.f32 %v487, %v587
      %v589 = vpop.f32.mrb[0].mxu0
      %v590 = vpop.f32.mrb[0].mxu0
      %v591 = vadd.f32 %v492, %v590
      %v592 = vpop.f32.mrb[0].mxu0
      %593 = vmatprep.mubr.bf16.mxu0 0
      %594 = vmatmul.mubr.bf16.gmra.mrb[0].mxu0 %v535
      %v595 = vpop.f32.mrb[0].mxu0
      %v596 = vadd.f32 %v497, %v595
      %v597 = vpop.f32.mrb[0].mxu0
      %v598 = vpop.f32.mrb[0].mxu0
      %v599 = vadd.f32 %v502, %v598
      %v600 = vpop.f32.mrb[0].mxu0
      %601 = vdwg.mxu0
      %602 = vst [vmem:[%s237] sm:$0xff] %v572
      %603 = vst [vmem:[%s237 + $0x8] sm:$0xff] %v575
      %604 = vst [vmem:[%s237 + $0x10] sm:$0xff] %v580
      %605 = vst [vmem:[%s237 + $0x18] sm:$0xff] %v583
      %606 = vst [vmem:[%s237 + $0x20] sm:$0xff] %v588
      %607 = vst [vmem:[%s237 + $0x28] sm:$0xff] %v591
      %608 = vst [vmem:[%s237 + $0x30] sm:$0xff] %v596
      %609 = vst [vmem:[%s237 + $0x38] sm:$0xff] %v599
      %p610 = scmp.lt.s32.totalorder %s15, 1
      %s611 = scalar_select %p610, %s15, 1
      %s612 = smul.addr %s611, 8
      %s613 = smul.addr %s612, 8
      %s614 = scalar_lea.vmem %s4, %s613
      // Predicated region
      $region37: #{sc_layer_forward.1} parent=35 // pred_check
        %p615 = pneg %p132
      $region38: #{sc_layer_forward.1} parent=35 // pred_check_branch
        %617 = sbr.rel (%p615) target = $region40
      $region39: #{sc_layer_forward.1} parent=35 // pred_region
        _
      $region40: #{sc_layer_forward.1} parent=35 // pred_fallthru
        _
    $region36: #{sc_layer_forward.1} parent=5 // pred_fallthru
      _
    %p618 = scmp.le.s32.totalorder 2, %s10
    // Predicated region
    $region41: #{sc_layer_forward.1} parent=5 // pred_check
      %p619 = pneg %p618
    $region42: #{sc_layer_forward.1} parent=5 // pred_check_branch
      %621 = sbr.rel (%p619) target = $region44
    $region43: #{sc_layer_forward.1} parent=5 // pred_region
      %s622 = ssub.s32 %s10, 2
      // Predicated region
      $region45: #{sc_layer_forward.1} parent=43 // pred_check
        %p623 = pneg %p138
      $region46: #{sc_layer_forward.1} parent=43 // pred_check_branch
        %625 = sbr.rel (%p623) target = $region48
      $region47: #{sc_layer_forward.1} parent=43 // pred_region
        %p626 = scmp.lt.s32.totalorder %s16, 1
        %s627 = scalar_select %p626, %s16, 1
        %s628 = smul.addr %s627, 8
        %s629 = smul.addr %s628, 8
        %s630 = scalar_lea.vmem %s4, %s629
      $region48: #{sc_layer_forward.1} parent=43 // pred_fallthru
        _
    $region44: #{sc_layer_forward.1} parent=5 // pred_fallthru
      _
  $region6: #{sc_layer_forward.1} parent=0 // loop_footer
    %s14 = sadd.s32 1, %s10
  $region7: #{sc_layer_forward.1} parent=0 // loop_footer_branch
    %9 = sbr.rel target = $region3
  $region8: #{sc_layer_forward.1} parent=0 // loop_exit
    _

</llo_original>
